<compile_context>
chip_gen: v6e
topology: v6e:2x2x1
jax: 0.10.0
libtpu: 0.0.40
codegen_flags: <defaults>
</compile_context>

<pallas_src>
import functools

import jax
import jax.numpy as jnp
from jax.experimental import pallas as pl
from jax.experimental.pallas import tpu as pltpu

LOG_STD_MIN = -20.0
LOG_STD_MAX = 2.0

_LANE = 128


def _round_up(x, m):
    return ((x + m - 1) // m) * m


def _pad2d(a, rows, cols, dtype=None):
    out = jnp.pad(a, ((0, rows - a.shape[0]), (0, cols - a.shape[1])))
    if dtype is not None and out.dtype != jnp.dtype(dtype):
        out = out.astype(dtype)
    return out


def _actor_kernel(num_hidden, num_actions, compute_dtype, *refs):
    """Kernel body.

    refs layout:
      x_ref,                         # (TB, D0p) activation tile (f32 or compute dtype)
      (w_i, b_i) * num_hidden,       # hidden layers (W compute dtype, b f32)
      wh_ref, bh_ref,                # fused (mean | log_std) head, lane-padded
      out_ref                        # (TB, HEADp): [mean | log_std | pad]
    """
    x_ref = refs[0]
    hidden_refs = refs[1:1 + 2 * num_hidden]
    wh_ref = refs[1 + 2 * num_hidden]
    bh_ref = refs[2 + 2 * num_hidden]
    out_ref = refs[-1]

    # Per-tile cast on the VPU (no-op when the wrapper already fused pad+cast).
    x = x_ref[...].astype(compute_dtype)

    # hidden_layer_fp: Linear -> ReLU.  MXU dot in compute_dtype, f32 accumulate;
    # bias-add / ReLU on the VPU in f32.
    for i in range(num_hidden):
        w = hidden_refs[2 * i][...]
        b = hidden_refs[2 * i + 1][...]
        y = jnp.dot(x, w, preferred_element_type=jnp.float32) + b
        x = jnp.maximum(y, 0.0).astype(compute_dtype)

    # Fused mean / log_std head: one lane-padded matmul, one contiguous store.
    y = jnp.dot(x, wh_ref[...], preferred_element_type=jnp.float32) + bh_ref[...]
    # Columns [0, A) = mean, [A, 2A) = log_std (clamped).  The clamp also hits
    # the padding columns [2A, HEADp); harmless because they are sliced off in
    # the wrapper.  (If the VALU slot ever saturates, swap the iota+where for a
    # precomputed resident (1, HEADp) mask input.)
    col = jax.lax.broadcasted_iota(jnp.int32, y.shape, dimension=1)
    y = jnp.where(col >= num_actions,
                  jnp.clip(y, LOG_STD_MIN, LOG_STD_MAX),
                  y)
    out_ref[...] = y.astype(out_ref.dtype)


def prepare_actor_params(params, *, compute_dtype=jnp.bfloat16):
    """One-time weight preparation (pad to lane multiples, fuse heads, cast).

    Args:
      params: dict with keys:
        "hidden": list of (W_i, b_i), W_i (in, out), b_i (1, out)
        "mean":   (W_mean, b_mean)
        "log_std":(W_ls, b_ls)
      compute_dtype: dtype fed to the MXU (bf16 default; accumulation is f32).
    Returns: dict of padded/cast device arrays + static metadata.
    """
    hidden = params["hidden"]
    wm, bm = params["mean"]
    ws, bs = params["log_std"]
    num_actions = wm.shape[1]
    num_inputs = hidden[0][0].shape[0]

    dims = [num_inputs] + [w.shape[1] for (w, _) in hidden]
    dims_p = [_round_up(d, _LANE) for d in dims]
    head_p = _round_up(2 * num_actions, _LANE)

    w_list, b_list = [], []
    for li, (w, b) in enumerate(hidden):
        w_list.append(_pad2d(w, dims_p[li], dims_p[li + 1], compute_dtype))
        b_list.append(_pad2d(b, 1, dims_p[li + 1], jnp.float32))
    w_head = _pad2d(jnp.concatenate([wm, ws], axis=1), dims_p[-1], head_p,
                    compute_dtype)
    b_head = _pad2d(jnp.concatenate([bm, bs], axis=1), 1, head_p, jnp.float32)

    return {
        "w": w_list, "b": b_list, "w_head": w_head, "b_head": b_head,
        "dims_p": tuple(dims_p), "head_p": head_p,
        "num_inputs": num_inputs, "num_actions": num_actions,
        "num_hidden": len(hidden),
        "compute_dtype": jnp.dtype(compute_dtype),
    }


def actor_forward(state, prepared, *, batch_tile=512, out_dtype=jnp.float32):
    """Run ActorNetwork.forward on TPU via a single Pallas kernel.

    Args:
      state: (batch, num_inputs) float32.
      prepared: output of prepare_actor_params (built once, reused every call).
      batch_tile: target rows per grid step (auto-shrunk to fit VMEM).
      out_dtype: dtype of the kernel's output slab (f32 default; bf16 halves
        the dominant HBM writeback stream on v5e, upcast happens in-wrapper).
    Returns:
      (mean, log_std): each (batch, num_actions) float32.
    """
    compute_dtype = prepared["compute_dtype"]
    dims_p = list(prepared["dims_p"])
    head_p = prepared["head_p"]
    num_hidden = prepared["num_hidden"]
    num_actions = prepared["num_actions"]

    batch, num_inputs = state.shape
    assert num_inputs == prepared["num_inputs"], "state width mismatch"

    act_itemsize = compute_dtype.itemsize
    out_itemsize = jnp.dtype(out_dtype).itemsize
    sublane = 16 if act_itemsize == 2 else 8

    w_list, b_list = prepared["w"], prepared["b"]
    w_head, b_head = prepared["w_head"], prepared["b_head"]
    weight_bytes = sum(int(w.size) * w.dtype.itemsize for w in w_list + [w_head])
    bias_bytes = sum(int(b.size) * b.dtype.itemsize for b in b_list + [b_head])

    # --- generation-aware VMEM budget -----------------------------------------
    try:
        vmem_cap = int(pltpu.get_tpu_info().vmem_capacity_bytes)
    except Exception:
        vmem_cap = 64 * 2 ** 20  # conservative (v7x per-TC)
    # ~100 MiB on 128 MiB chips (v5e/v6e), capacity-8 MiB (~56 MiB) on v7x.
    budget = max(min(vmem_cap - 8 * 2 ** 20, 100 * 2 ** 20), 24 * 2 ** 20)

    widest = max(dims_p + [head_p])

    def vmem_needed(tb):
        in_tile = tb * dims_p[0] * 4            # input tile (worst case f32)
        out_tile = tb * head_p * out_itemsize   # output tile
        act = tb * widest * (4 + act_itemsize)  # f32 y + compute-dtype x live together
        # Weights counted x2 so the double-buffered fallback path also fits;
        # actual usage with Buffered(1) is lower -> extra Mosaic scratch headroom.
        return (2 * (weight_bytes + bias_bytes)
                + 2 * (in_tile + out_tile)      # double-buffered activation streams
                + act)

    # --- size the batch tile ----------------------------------------------------
    tb = min(_round_up(batch_tile, sublane), _round_up(batch, sublane))
    while tb > sublane and vmem_needed(tb) > int(budget * 0.9):
        tb = max(sublane, _round_up(tb // 2, sublane))

    # Keep >=2 grid steps for large batches so both v7x TensorCores do work
    # (harmless elsewhere: per-step overhead amortizes above ~256 rows).
    if batch >= 512 and _round_up(batch, tb) // tb < 2:
        tb = _round_up((batch + 1) // 2, sublane)

    batch_p = _round_up(batch, tb)
    grid = (batch_p // tb,)

    # --- state: skip the wrapper cast when padding is a no-op -------------------
    no_pad = (batch_p == batch) and (dims_p[0] == num_inputs)
    if no_pad:
        x_p = state                                     # kernel casts per-tile
    else:
        x_p = _pad2d(state, batch_p, dims_p[0], compute_dtype)  # fused pad+cast

    flat_inputs = [x_p]
    for w, b in zip(w_list, b_list):
        flat_inputs.extend([w, b])
    flat_inputs.extend([w_head, b_head])

    flops = 2 * batch_p * (sum(dims_p[i] * dims_p[i + 1] for i in range(num_hidden))
                           + dims_p[-1] * head_p)
    bytes_accessed = (int(x_p.size) * x_p.dtype.itemsize
                      + weight_bytes + bias_bytes
                      + batch_p * head_p * out_itemsize)

    kernel = functools.partial(_actor_kernel, num_hidden, num_actions,
                               compute_dtype)
    out_shape = jax.ShapeDtypeStruct((batch_p, head_p), out_dtype)

    def run(single_buffer):
        def resident_spec(shape):
            if single_buffer:
                # Block index never changes -> one VMEM copy is enough.
                return pl.BlockSpec(shape, lambda i: (0, 0),
                                    pipeline_mode=pl.Buffered(1))
            return pl.BlockSpec(shape, lambda i: (0, 0))

        in_specs = [pl.BlockSpec((tb, dims_p[0]), lambda i: (i, 0))]
        for a in flat_inputs[1:]:
            in_specs.append(resident_spec(a.shape))
        out_specs = pl.BlockSpec((tb, head_p), lambda i: (i, 0))

        return pl.pallas_call(
            kernel,
            out_shape=out_shape,
            grid=grid,
            in_specs=in_specs,
            out_specs=out_specs,
            compiler_params=pltpu.CompilerParams(
                dimension_semantics=("parallel",),
                vmem_limit_bytes=int(budget),
            ),
            cost_estimate=pl.CostEstimate(flops=flops,
                                          transcendentals=0,
                                          bytes_accessed=bytes_accessed),
        )(*flat_inputs)

    try:
        out = run(single_buffer=True)
    except Exception:
        # Older jax without pipeline_mode / Buffered(1): default double-buffering.
        out = run(single_buffer=False)

    # Single contiguous slice of the padded output, then split.
    head = out[:batch, :2 * num_actions]
    if head.dtype != jnp.float32:
        head = head.astype(jnp.float32)
    mean = head[:, :num_actions]
    log_std = head[:, num_actions:]
    return mean, log_std


def init_actor_params(key, num_inputs, num_actions, arch,
                      init_w_bounds=0.003, init_b_value=0.1):
    """Parameter init mirroring ActorNetwork.__init__ shapes / init style.

    Weights stored transposed: (in_features, out_features); biases (1, out).
    """
    params = {"hidden": []}
    in_dim = num_inputs
    keys = jax.random.split(key, 2 * len(arch) + 4)
    k_idx = 0
    for li, out_dim in enumerate(arch):
        bound = 1.0 / jnp.sqrt(jnp.float32(in_dim))
        w = jax.random.uniform(keys[k_idx], (in_dim, out_dim),
                               minval=-bound, maxval=bound, dtype=jnp.float32)
        k_idx += 1
        if li == 0:
            b = jax.random.uniform(keys[k_idx], (1, out_dim),
                                   minval=-bound, maxval=bound, dtype=jnp.float32)
        else:
            b = jnp.full((1, out_dim), init_b_value, dtype=jnp.float32)
        k_idx += 1
        params["hidden"].append((w, b))
        in_dim = out_dim

    for name in ("mean", "log_std"):
        w = jax.random.uniform(keys[k_idx], (in_dim, num_actions),
                               minval=-init_w_bounds, maxval=init_w_bounds,
                               dtype=jnp.float32)
        k_idx += 1
        b = jax.random.uniform(keys[k_idx], (1, num_actions),
                               minval=-init_w_bounds, maxval=init_w_bounds,
                               dtype=jnp.float32)
        k_idx += 1
        params[name] = (w, b)
    return params


def actor_forward_ref(state, params):
    """Pure-JAX f32 reference for correctness checking."""
    x = state
    for (w, b) in params["hidden"]:
        x = jnp.maximum(x @ w + b, 0.0)
    mean = x @ params["mean"][0] + params["mean"][1]
    log_std = jnp.clip(x @ params["log_std"][0] + params["log_std"][1],
                       LOG_STD_MIN, LOG_STD_MAX)
    return mean, log_std


if __name__ == "__main__":
    key = jax.random.PRNGKey(0)
    k_params, k_state = jax.random.split(key)

    batch = 2
    num_inputs = 16
    num_actions = 8
    arch = [32, 32]

    params = init_actor_params(k_params, num_inputs, num_actions, arch)
    state = jax.random.normal(k_state, (batch, num_inputs), dtype=jnp.float32)

    mean_ref, log_std_ref = actor_forward_ref(state, params)

    # bf16 MXU path (default): weights prepared once, f32 accumulation.
    prepared_bf16 = prepare_actor_params(params, compute_dtype=jnp.bfloat16)
    mean_bf, log_std_bf = actor_forward(state, prepared_bf16)
    jax.block_until_ready((mean_bf, log_std_bf))
    assert mean_bf.shape == (batch, num_actions)
    assert log_std_bf.shape == (batch, num_actions)
    assert jnp.allclose(mean_bf, mean_ref, atol=2e-2), "mean mismatch (bf16)"
    assert jnp.allclose(log_std_bf, log_std_ref, atol=2e-2), "log_std mismatch (bf16)"

    # Full f32 path — tight tolerance against the reference.
    prepared_f32 = prepare_actor_params(params, compute_dtype=jnp.float32)
    mean_f32, log_std_f32 = actor_forward(state, prepared_f32)
    jax.block_until_ready((mean_f32, log_std_f32))
    assert jnp.allclose(mean_f32, mean_ref, atol=1e-4), "mean mismatch (f32)"
    assert jnp.allclose(log_std_f32, log_std_ref, atol=1e-4), "log_std mismatch (f32)"

    # TODO(synk): ActorNetwork.sample() (Normal.rsample + tanh log-prob
    # correction) is RNG-driven host-side logic; only the deterministic
    # forward() hot path is implemented as a kernel.

    print("KERNEL_OK")
</pallas_src>

<mosaic_0001>
module attributes {stable_mosaic.version = 11 : i64} {
  func.func @_actor_kernel(%arg0: i32, %arg1: memref<16x128xbf16, #tpu.memory_space<vmem>>, %arg2: memref<128x128xbf16, #tpu.memory_space<vmem>>, %arg3: memref<1x128xf32, #tpu.memory_space<vmem>>, %arg4: memref<128x128xbf16, #tpu.memory_space<vmem>>, %arg5: memref<1x128xf32, #tpu.memory_space<vmem>>, %arg6: memref<128x128xbf16, #tpu.memory_space<vmem>>, %arg7: memref<1x128xf32, #tpu.memory_space<vmem>>, %arg8: memref<16x128xf32, #tpu.memory_space<vmem>>) attributes {dimension_semantics = [#tpu.dimension_semantics<parallel>], iteration_bounds = array<i64: 1>, scalar_prefetch = 0 : i64, scratch_operands = 0 : i64, tpu.core_type = #tpu.core_type<tc>, window_params = [{transform_indices = @transform_0, window_bounds = array<i64: 16, 128>}, {pipeline_mode = #tpu.pipeline_mode<synchronous>, transform_indices = @transform_1, window_bounds = array<i64: 128, 128>}, {pipeline_mode = #tpu.pipeline_mode<synchronous>, transform_indices = @transform_2, window_bounds = array<i64: 1, 128>}, {pipeline_mode = #tpu.pipeline_mode<synchronous>, transform_indices = @transform_3, window_bounds = array<i64: 128, 128>}, {pipeline_mode = #tpu.pipeline_mode<synchronous>, transform_indices = @transform_4, window_bounds = array<i64: 1, 128>}, {pipeline_mode = #tpu.pipeline_mode<synchronous>, transform_indices = @transform_5, window_bounds = array<i64: 128, 128>}, {pipeline_mode = #tpu.pipeline_mode<synchronous>, transform_indices = @transform_6, window_bounds = array<i64: 1, 128>}, {transform_indices = @transform_7, window_bounds = array<i64: 16, 128>}]} {
    %c0 = arith.constant 0 : index
    %c0_0 = arith.constant 0 : index
    %0 = vector.load %arg1[%c0, %c0_0] : memref<16x128xbf16, #tpu.memory_space<vmem>>, vector<16x128xbf16>
    %c0_1 = arith.constant 0 : index
    %c0_2 = arith.constant 0 : index
    %1 = vector.load %arg2[%c0_1, %c0_2] : memref<128x128xbf16, #tpu.memory_space<vmem>>, vector<128x128xbf16>
    %c0_3 = arith.constant 0 : index
    %c0_4 = arith.constant 0 : index
    %2 = vector.load %arg3[%c0_3, %c0_4] : memref<1x128xf32, #tpu.memory_space<vmem>>, vector<1x128xf32>
    %cst = arith.constant dense<0.000000e+00> : vector<16x128xf32>
    %3 = tpu.matmul %0, %1, %cst {dimension_numbers = #tpu.dot_dimension_numbers<[1], [0], [0], [1], [0, 0, 1, 1], [], []>} : vector<16x128xbf16>, vector<128x128xbf16>, vector<16x128xf32> -> vector<16x128xf32>
    %4 = vector.broadcast %2 : vector<1x128xf32> to vector<16x128xf32>
    %5 = arith.addf %3, %4 : vector<16x128xf32>
    %cst_5 = arith.constant 0.000000e+00 : f32
    %6 = vector.broadcast %cst_5 : f32 to vector<16x128xf32>
    %7 = arith.maximumf %5, %6 : vector<16x128xf32>
    %8 = arith.truncf %7 : vector<16x128xf32> to vector<16x128xbf16>
    %c0_6 = arith.constant 0 : index
    %c0_7 = arith.constant 0 : index
    %9 = vector.load %arg4[%c0_6, %c0_7] : memref<128x128xbf16, #tpu.memory_space<vmem>>, vector<128x128xbf16>
    %c0_8 = arith.constant 0 : index
    %c0_9 = arith.constant 0 : index
    %10 = vector.load %arg5[%c0_8, %c0_9] : memref<1x128xf32, #tpu.memory_space<vmem>>, vector<1x128xf32>
    %cst_10 = arith.constant dense<0.000000e+00> : vector<16x128xf32>
    %11 = tpu.matmul %8, %9, %cst_10 {dimension_numbers = #tpu.dot_dimension_numbers<[1], [0], [0], [1], [0, 0, 1, 1], [], []>} : vector<16x128xbf16>, vector<128x128xbf16>, vector<16x128xf32> -> vector<16x128xf32>
    %12 = vector.broadcast %10 : vector<1x128xf32> to vector<16x128xf32>
    %13 = arith.addf %11, %12 : vector<16x128xf32>
    %cst_11 = arith.constant 0.000000e+00 : f32
    %14 = vector.broadcast %cst_11 : f32 to vector<16x128xf32>
    %15 = arith.maximumf %13, %14 : vector<16x128xf32>
    %16 = arith.truncf %15 : vector<16x128xf32> to vector<16x128xbf16>
    %c0_12 = arith.constant 0 : index
    %c0_13 = arith.constant 0 : index
    %17 = vector.load %arg6[%c0_12, %c0_13] : memref<128x128xbf16, #tpu.memory_space<vmem>>, vector<128x128xbf16>
    %cst_14 = arith.constant dense<0.000000e+00> : vector<16x128xf32>
    %18 = tpu.matmul %16, %17, %cst_14 {dimension_numbers = #tpu.dot_dimension_numbers<[1], [0], [0], [1], [0, 0, 1, 1], [], []>} : vector<16x128xbf16>, vector<128x128xbf16>, vector<16x128xf32> -> vector<16x128xf32>
    %c0_15 = arith.constant 0 : index
    %c0_16 = arith.constant 0 : index
    %19 = vector.load %arg7[%c0_15, %c0_16] : memref<1x128xf32, #tpu.memory_space<vmem>>, vector<1x128xf32>
    %20 = vector.broadcast %19 : vector<1x128xf32> to vector<16x128xf32>
    %21 = arith.addf %18, %20 : vector<16x128xf32>
    %22 = tpu.iota {dimensions = array<i32: 1>} : vector<16x128xi32>
    %c8_i32 = arith.constant 8 : i32
    %23 = vector.broadcast %c8_i32 : i32 to vector<16x128xi32>
    %24 = arith.cmpi sge, %22, %23 : vector<16x128xi32>
    %cst_17 = arith.constant -2.000000e+01 : f32
    %cst_18 = arith.constant 2.000000e+00 : f32
    %25 = vector.broadcast %cst_17 : f32 to vector<16x128xf32>
    %26 = arith.maximumf %25, %21 : vector<16x128xf32>
    %27 = vector.broadcast %cst_18 : f32 to vector<16x128xf32>
    %28 = arith.minimumf %27, %26 : vector<16x128xf32>
    %29 = arith.select %24, %28, %21 : vector<16x128xi1>, vector<16x128xf32>
    %c0_19 = arith.constant 0 : index
    %c0_20 = arith.constant 0 : index
    %30 = vector.load %arg8[%c0_19, %c0_20] : memref<16x128xf32, #tpu.memory_space<vmem>>, vector<16x128xf32>
    tpu.vector_store %arg8[%c0_19, %c0_20], %29 {strides = array<i32>} : memref<16x128xf32, #tpu.memory_space<vmem>>, vector<16x128xf32>,
    return
  }
  func.func @transform_0(%arg0: i32) -> (i32, i32) {
    %c0_i32 = arith.constant 0 : i32
    %c0_i32_0 = arith.constant 0 : i32
    return %arg0, %c0_i32 : i32, i32
  }
  func.func @transform_1(%arg0: i32) -> (i32, i32) {
    %c0_i32 = arith.constant 0 : i32
    %c0_i32_0 = arith.constant 0 : i32
    %c0_i32_1 = arith.constant 0 : i32
    return %c0_i32, %c0_i32_0 : i32, i32
  }
  func.func @transform_2(%arg0: i32) -> (i32, i32) {
    %c0_i32 = arith.constant 0 : i32
    %c0_i32_0 = arith.constant 0 : i32
    %c0_i32_1 = arith.constant 0 : i32
    return %c0_i32, %c0_i32_0 : i32, i32
  }
  func.func @transform_3(%arg0: i32) -> (i32, i32) {
    %c0_i32 = arith.constant 0 : i32
    %c0_i32_0 = arith.constant 0 : i32
    %c0_i32_1 = arith.constant 0 : i32
    return %c0_i32, %c0_i32_0 : i32, i32
  }
  func.func @transform_4(%arg0: i32) -> (i32, i32) {
    %c0_i32 = arith.constant 0 : i32
    %c0_i32_0 = arith.constant 0 : i32
    %c0_i32_1 = arith.constant 0 : i32
    return %c0_i32, %c0_i32_0 : i32, i32
  }
  func.func @transform_5(%arg0: i32) -> (i32, i32) {
    %c0_i32 = arith.constant 0 : i32
    %c0_i32_0 = arith.constant 0 : i32
    %c0_i32_1 = arith.constant 0 : i32
    return %c0_i32, %c0_i32_0 : i32, i32
  }
  func.func @transform_6(%arg0: i32) -> (i32, i32) {
    %c0_i32 = arith.constant 0 : i32
    %c0_i32_0 = arith.constant 0 : i32
    %c0_i32_1 = arith.constant 0 : i32
    return %c0_i32, %c0_i32_0 : i32, i32
  }
  func.func @transform_7(%arg0: i32) -> (i32, i32) {
    %c0_i32 = arith.constant 0 : i32
    %c0_i32_0 = arith.constant 0 : i32
    return %arg0, %c0_i32 : i32, i32
  }
}

module attributes {stable_mosaic.version = 11 : i64} {
  func.func @_actor_kernel(%arg0: i32, %arg1: memref<16x128xbf16, #tpu.memory_space<vmem>>, %arg2: memref<128x128xbf16, #tpu.memory_space<vmem>>, %arg3: memref<1x128xf32, #tpu.memory_space<vmem>>, %arg4: memref<128x128xbf16, #tpu.memory_space<vmem>>, %arg5: memref<1x128xf32, #tpu.memory_space<vmem>>, %arg6: memref<128x128xbf16, #tpu.memory_space<vmem>>, %arg7: memref<1x128xf32, #tpu.memory_space<vmem>>, %arg8: memref<16x128xf32, #tpu.memory_space<vmem>>) attributes {dimension_semantics = [#tpu.dimension_semantics<parallel>], iteration_bounds = array<i64: 1>, scalar_prefetch = 0 : i64, scratch_operands = 0 : i64, tpu.core_type = #tpu.core_type<tc>, window_params = [{transform_indices = @transform_0, window_bounds = array<i64: 16, 128>}, {pipeline_mode = #tpu.pipeline_mode<synchronous>, transform_indices = @transform_1, window_bounds = array<i64: 128, 128>}, {pipeline_mode = #tpu.pipeline_mode<synchronous>, transform_indices = @transform_2, window_bounds = array<i64: 1, 128>}, {pipeline_mode = #tpu.pipeline_mode<synchronous>, transform_indices = @transform_3, window_bounds = array<i64: 128, 128>}, {pipeline_mode = #tpu.pipeline_mode<synchronous>, transform_indices = @transform_4, window_bounds = array<i64: 1, 128>}, {pipeline_mode = #tpu.pipeline_mode<synchronous>, transform_indices = @transform_5, window_bounds = array<i64: 128, 128>}, {pipeline_mode = #tpu.pipeline_mode<synchronous>, transform_indices = @transform_6, window_bounds = array<i64: 1, 128>}, {transform_indices = @transform_7, window_bounds = array<i64: 16, 128>}]} {
    %c0 = arith.constant 0 : index
    %c0_0 = arith.constant 0 : index
    %0 = vector.load %arg1[%c0, %c0_0] : memref<16x128xbf16, #tpu.memory_space<vmem>>, vector<16x128xbf16>
    %c0_1 = arith.constant 0 : index
    %c0_2 = arith.constant 0 : index
    %1 = vector.load %arg2[%c0_1, %c0_2] : memref<128x128xbf16, #tpu.memory_space<vmem>>, vector<128x128xbf16>
    %c0_3 = arith.constant 0 : index
    %c0_4 = arith.constant 0 : index
    %2 = vector.load %arg3[%c0_3, %c0_4] : memref<1x128xf32, #tpu.memory_space<vmem>>, vector<1x128xf32>
    %cst = arith.constant dense<0.000000e+00> : vector<16x128xf32>
    %3 = tpu.matmul %0, %1, %cst {dimension_numbers = #tpu.dot_dimension_numbers<[1], [0], [0], [1], [0, 0, 1, 1], [], []>} : vector<16x128xbf16>, vector<128x128xbf16>, vector<16x128xf32> -> vector<16x128xf32>
    %4 = vector.broadcast %2 : vector<1x128xf32> to vector<16x128xf32>
    %5 = arith.addf %3, %4 : vector<16x128xf32>
    %cst_5 = arith.constant 0.000000e+00 : f32
    %6 = vector.broadcast %cst_5 : f32 to vector<16x128xf32>
    %7 = arith.maximumf %5, %6 : vector<16x128xf32>
    %8 = arith.truncf %7 : vector<16x128xf32> to vector<16x128xbf16>
    %c0_6 = arith.constant 0 : index
    %c0_7 = arith.constant 0 : index
    %9 = vector.load %arg4[%c0_6, %c0_7] : memref<128x128xbf16, #tpu.memory_space<vmem>>, vector<128x128xbf16>
    %c0_8 = arith.constant 0 : index
    %c0_9 = arith.constant 0 : index
    %10 = vector.load %arg5[%c0_8, %c0_9] : memref<1x128xf32, #tpu.memory_space<vmem>>, vector<1x128xf32>
    %cst_10 = arith.constant dense<0.000000e+00> : vector<16x128xf32>
    %11 = tpu.matmul %8, %9, %cst_10 {dimension_numbers = #tpu.dot_dimension_numbers<[1], [0], [0], [1], [0, 0, 1, 1], [], []>} : vector<16x128xbf16>, vector<128x128xbf16>, vector<16x128xf32> -> vector<16x128xf32>
    %12 = vector.broadcast %10 : vector<1x128xf32> to vector<16x128xf32>
    %13 = arith.addf %11, %12 : vector<16x128xf32>
    %cst_11 = arith.constant 0.000000e+00 : f32
    %14 = vector.broadcast %cst_11 : f32 to vector<16x128xf32>
    %15 = arith.maximumf %13, %14 : vector<16x128xf32>
    %16 = arith.truncf %15 : vector<16x128xf32> to vector<16x128xbf16>
    %c0_12 = arith.constant 0 : index
    %c0_13 = arith.constant 0 : index
    %17 = vector.load %arg6[%c0_12, %c0_13] : memref<128x128xbf16, #tpu.memory_space<vmem>>, vector<128x128xbf16>
    %cst_14 = arith.constant dense<0.000000e+00> : vector<16x128xf32>
    %18 = tpu.matmul %16, %17, %cst_14 {dimension_numbers = #tpu.dot_dimension_numbers<[1], [0], [0], [1], [0, 0, 1, 1], [], []>} : vector<16x128xbf16>, vector<128x128xbf16>, vector<16x128xf32> -> vector<16x128xf32>
    %c0_15 = arith.constant 0 : index
    %c0_16 = arith.constant 0 : index
    %19 = vector.load %arg7[%c0_15, %c0_16] : memref<1x128xf32, #tpu.memory_space<vmem>>, vector<1x128xf32>
    %20 = vector.broadcast %19 : vector<1x128xf32> to vector<16x128xf32>
    %21 = arith.addf %18, %20 : vector<16x128xf32>
    %22 = tpu.iota {dimensions = array<i32: 1>} : vector<16x128xi32>
    %c8_i32 = arith.constant 8 : i32
    %23 = vector.broadcast %c8_i32 : i32 to vector<16x128xi32>
    %24 = arith.cmpi sge, %22, %23 : vector<16x128xi32>
    %cst_17 = arith.constant -2.000000e+01 : f32
    %cst_18 = arith.constant 2.000000e+00 : f32
    %25 = vector.broadcast %cst_17 : f32 to vector<16x128xf32>
    %26 = arith.maximumf %25, %21 : vector<16x128xf32>
    %27 = vector.broadcast %cst_18 : f32 to vector<16x128xf32>
    %28 = arith.minimumf %27, %26 : vector<16x128xf32>
    %29 = arith.select %24, %28, %21 : vector<16x128xi1>, vector<16x128xf32>
    %c0_19 = arith.constant 0 : index
    %c0_20 = arith.constant 0 : index
    %30 = vector.load %arg8[%c0_19, %c0_20] : memref<16x128xf32, #tpu.memory_space<vmem>>, vector<16x128xf32>
    tpu.vector_store %arg8[%c0_19, %c0_20], %29 {strides = array<i32>} : memref<16x128xf32, #tpu.memory_space<vmem>>, vector<16x128xf32>,
    return
  }
  func.func @transform_0(%arg0: i32) -> (i32, i32) {
    %c0_i32 = arith.constant 0 : i32
    %c0_i32_0 = arith.constant 0 : i32
    return %arg0, %c0_i32 : i32, i32
  }
  func.func @transform_1(%arg0: i32) -> (i32, i32) {
    %c0_i32 = arith.constant 0 : i32
    %c0_i32_0 = arith.constant 0 : i32
    %c0_i32_1 = arith.constant 0 : i32
    return %c0_i32, %c0_i32_0 : i32, i32
  }
  func.func @transform_2(%arg0: i32) -> (i32, i32) {
    %c0_i32 = arith.constant 0 : i32
    %c0_i32_0 = arith.constant 0 : i32
    %c0_i32_1 = arith.constant 0 : i32
    return %c0_i32, %c0_i32_0 : i32, i32
  }
  func.func @transform_3(%arg0: i32) -> (i32, i32) {
    %c0_i32 = arith.constant 0 : i32
    %c0_i32_0 = arith.constant 0 : i32
    %c0_i32_1 = arith.constant 0 : i32
    return %c0_i32, %c0_i32_0 : i32, i32
  }
  func.func @transform_4(%arg0: i32) -> (i32, i32) {
    %c0_i32 = arith.constant 0 : i32
    %c0_i32_0 = arith.constant 0 : i32
    %c0_i32_1 = arith.constant 0 : i32
    return %c0_i32, %c0_i32_0 : i32, i32
  }
  func.func @transform_5(%arg0: i32) -> (i32, i32) {
    %c0_i32 = arith.constant 0 : i32
    %c0_i32_0 = arith.constant 0 : i32
    %c0_i32_1 = arith.constant 0 : i32
    return %c0_i32, %c0_i32_0 : i32, i32
  }
  func.func @transform_6(%arg0: i32) -> (i32, i32) {
    %c0_i32 = arith.constant 0 : i32
    %c0_i32_0 = arith.constant 0 : i32
    %c0_i32_1 = arith.constant 0 : i32
    return %c0_i32, %c0_i32_0 : i32, i32
  }
  func.func @transform_7(%arg0: i32) -> (i32, i32) {
    %c0_i32 = arith.constant 0 : i32
    %c0_i32_0 = arith.constant 0 : i32
    return %arg0, %c0_i32 : i32, i32
  }
}

</mosaic_0001>

<llo_original>
// kernel: tpu_custom_call.1
$region0: #{tpu_custom_call.1}
  #allocation0 [shape = 'u32[]', space=smem, size = 0x4, offset = 0x4, fixed_abs, tag = 'smem constant byte address 0x4 - core index']
  #allocation1 [shape = 'u32[144,128]{1,0:T(1,128)}', space=vmem, size = 0x12000, scoped, tag = 'internal scratch']
  %s0 = inlined_call_operand.hbm [shape: bf16[16,128], index: 0, kind: input, shape index: {}]
  %s1 = inlined_call_operand.hbm [shape: bf16[128,128], index: 1, kind: input, shape index: {}]
  %s2 = inlined_call_operand.vmem [shape: f32[1,128], index: 2, kind: input, shape index: {}]
  %s3 = inlined_call_operand.hbm [shape: bf16[128,128], index: 3, kind: input, shape index: {}]
  %s4 = inlined_call_operand.vmem [shape: f32[1,128], index: 4, kind: input, shape index: {}]
  %s5 = inlined_call_operand.hbm [shape: bf16[128,128], index: 5, kind: input, shape index: {}]
  %s6 = inlined_call_operand.vmem [shape: f32[1,128], index: 6, kind: input, shape index: {}]
  %s7 = inlined_call_operand.hbm [shape: f32[16,128], index: 7, kind: output, shape index: {}]
  %s8 = sld [smem:[#allocation0]]
  $region54: #{tpu_custom_call.1} parent=0
    _
  %s10 = ssub.s32 1, %s8
  %s11 = scalar_select 0, %s10, %s8
  $region1: #{tpu_custom_call.1} parent=0
    #allocation2 [shape = 'u8[4096]{0}', space=vmem, size = 0x1000, scoped, tag = 'input window, operand 0, single buffered']
    #allocation3 [shape = 's32[1]{0}', space=sflag, size = 0x4, scoped, tag = 'scoped memory for tpu_custom_call.1']
    #allocation4 [shape = 's32[1]{0}', space=sflag, size = 0x4, scoped, tag = 'scoped memory for tpu_custom_call.1']
    #allocation5 [shape = 'u8[32768]{0}', space=vmem, size = 0x8000, scoped, tag = 'input window, operand 1, single buffered']
    #allocation6 [shape = 's32[1]{0}', space=sflag, size = 0x4, scoped, tag = 'scoped memory for tpu_custom_call.1']
    #allocation7 [shape = 'u8[32768]{0}', space=vmem, size = 0x8000, scoped, tag = 'input window, operand 3, single buffered']
    #allocation8 [shape = 'u8[32768]{0}', space=vmem, size = 0x8000, scoped, tag = 'input window, operand 5, single buffered']
    #allocation9 [shape = 's32[1]{0}', space=sflag, size = 0x4, scoped, tag = 'scoped memory for tpu_custom_call.1']
    #allocation10 [shape = 'u8[8192]{0}', space=vmem, size = 0x2000, scoped, tag = 'output window, operand 0, single buffered']
    %12 = vsyncpa [#allocation3], 0
    %13 = vsyncpa [#allocation6], 0
    %14 = vsyncpa [#allocation9], 0
    %15 = vsyncpa [#allocation4], 0
    // Predicated region
    $region2: #{tpu_custom_call.1} parent=1 // pred_check
      _
    $region3: #{tpu_custom_call.1} parent=1 // pred_check_branch
      %17 = sbr.rel (0) target = $region5
    $region4: #{tpu_custom_call.1} parent=1 // pred_region
      %s19 = ssub.s32 128, 128
      %20 = vsyncadd [#allocation3], %s19
      %s21 = sshll.u32 [#allocation2], 4
      %s22 = int_to_ptr.vmem [resolvable:$true] %s21
      %27 = dma.hbm_to_vmem [thread:$0]  %s0, 128, %s22, [#allocation3], 64, 64, 4
    $region5: #{tpu_custom_call.1} parent=1 // pred_fallthru
      _
    // Predicated region
    $region6: #{tpu_custom_call.1} parent=1 // pred_check
      _
    $region7: #{tpu_custom_call.1} parent=1 // pred_check_branch
      %29 = sbr.rel (0) target = $region9
    $region8: #{tpu_custom_call.1} parent=1 // pred_region
      %s31 = ssub.s32 1024, 1024
      %32 = vsyncadd [#allocation6], %s31
      %s33 = sshll.u32 [#allocation5], 4
      %s34 = int_to_ptr.vmem [resolvable:$true] %s33
      %39 = dma.hbm_to_vmem [thread:$0]  %s1, 1024, %s34, [#allocation6], 64, 64, 4
    $region9: #{tpu_custom_call.1} parent=1 // pred_fallthru
      _
    // Predicated region
    $region10: #{tpu_custom_call.1} parent=1 // pred_check
      _
    $region11: #{tpu_custom_call.1} parent=1 // pred_check_branch
      %41 = sbr.rel (0) target = $region13
    $region12: #{tpu_custom_call.1} parent=1 // pred_region
      _
    $region13: #{tpu_custom_call.1} parent=1 // pred_fallthru
      _
    // Predicated region
    $region14: #{tpu_custom_call.1} parent=1 // pred_check
      _
    $region15: #{tpu_custom_call.1} parent=1 // pred_check_branch
      %43 = sbr.rel (0) target = $region17
    $region16: #{tpu_custom_call.1} parent=1 // pred_region
      %s45 = ssub.s32 1024, 1024
      %46 = vsyncadd [#allocation6], %s45
      %s47 = sshll.u32 [#allocation7], 4
      %s48 = int_to_ptr.vmem [resolvable:$true] %s47
      %53 = dma.hbm_to_vmem [thread:$0]  %s3, 1024, %s48, [#allocation6], 64, 64, 4
    $region17: #{tpu_custom_call.1} parent=1 // pred_fallthru
      _
    // Predicated region
    $region18: #{tpu_custom_call.1} parent=1 // pred_check
      _
    $region19: #{tpu_custom_call.1} parent=1 // pred_check_branch
      %55 = sbr.rel (0) target = $region21
    $region20: #{tpu_custom_call.1} parent=1 // pred_region
      _
    $region21: #{tpu_custom_call.1} parent=1 // pred_fallthru
      _
    // Predicated region
    $region22: #{tpu_custom_call.1} parent=1 // pred_check
      _
    $region23: #{tpu_custom_call.1} parent=1 // pred_check_branch
      %57 = sbr.rel (0) target = $region25
    $region24: #{tpu_custom_call.1} parent=1 // pred_region
      %s59 = ssub.s32 1024, 1024
      %60 = vsyncadd [#allocation9], %s59
      %s61 = sshll.u32 [#allocation8], 4
      %s62 = int_to_ptr.vmem [resolvable:$true] %s61
      %67 = dma.hbm_to_vmem [thread:$0]  %s5, 1024, %s62, [#allocation9], 64, 64, 4
    $region25: #{tpu_custom_call.1} parent=1 // pred_fallthru
      _
    // Predicated region
    $region26: #{tpu_custom_call.1} parent=1 // pred_check
      _
    $region27: #{tpu_custom_call.1} parent=1 // pred_check_branch
      %69 = sbr.rel (0) target = $region29
    $region28: #{tpu_custom_call.1} parent=1 // pred_region
      _
    $region29: #{tpu_custom_call.1} parent=1 // pred_fallthru
      _
    // Predicated region
    $region30: #{tpu_custom_call.1} parent=1 // pred_check
      _
    $region31: #{tpu_custom_call.1} parent=1 // pred_check_branch
      %71 = sbr.rel (0) target = $region33
    $region32: #{tpu_custom_call.1} parent=1 // pred_region
      %72 = dma.done [#allocation3], 128
    $region33: #{tpu_custom_call.1} parent=1 // pred_fallthru
      _
    // Predicated region
    $region34: #{tpu_custom_call.1} parent=1 // pred_check
      _
    $region35: #{tpu_custom_call.1} parent=1 // pred_check_branch
      %74 = sbr.rel (0) target = $region37
    $region36: #{tpu_custom_call.1} parent=1 // pred_region
      %75 = dma.done [#allocation6], 1024
    $region37: #{tpu_custom_call.1} parent=1 // pred_fallthru
      _
    // Predicated region
    $region38: #{tpu_custom_call.1} parent=1 // pred_check
      _
    $region39: #{tpu_custom_call.1} parent=1 // pred_check_branch
      %77 = sbr.rel (0) target = $region41
    $region40: #{tpu_custom_call.1} parent=1 // pred_region
      %78 = dma.done [#allocation6], 1024
    $region41: #{tpu_custom_call.1} parent=1 // pred_fallthru
      _
    // Predicated region
    $region42: #{tpu_custom_call.1} parent=1 // pred_check
      _
    $region43: #{tpu_custom_call.1} parent=1 // pred_check_branch
      %80 = sbr.rel (0) target = $region45
    $region44: #{tpu_custom_call.1} parent=1 // pred_region
      %81 = dma.done [#allocation9], 1024
    $region45: #{tpu_custom_call.1} parent=1 // pred_fallthru
      _
    %v83 = vld [vmem:[#allocation2] sm:$0xf]
    %v84 = vld [vmem:[#allocation2 + $0x4] sm:$0xf]
    %v85 = vld [vmem:[#allocation5] sm:$0xf]
    %v86 = vld [vmem:[#allocation5 + $0x4] sm:$0xf]
    %v87 = vld [vmem:[#allocation5 + $0x8] sm:$0xf]
    %v88 = vld [vmem:[#allocation5 + $0xc] sm:$0xf]
    %v89 = vld [vmem:[#allocation5 + $0x10] sm:$0xf]
    %v90 = vld [vmem:[#allocation5 + $0x14] sm:$0xf]
    %v91 = vld [vmem:[#allocation5 + $0x18] sm:$0xf]
    %v92 = vld [vmem:[#allocation5 + $0x1c] sm:$0xf]
    %v93 = vld [vmem:[#allocation5 + $0x20] sm:$0xf]
    %v94 = vld [vmem:[#allocation5 + $0x24] sm:$0xf]
    %v95 = vld [vmem:[#allocation5 + $0x28] sm:$0xf]
    %v96 = vld [vmem:[#allocation5 + $0x2c] sm:$0xf]
    %v97 = vld [vmem:[#allocation5 + $0x30] sm:$0xf]
    %v98 = vld [vmem:[#allocation5 + $0x34] sm:$0xf]
    %v99 = vld [vmem:[#allocation5 + $0x38] sm:$0xf]
    %v100 = vld [vmem:[#allocation5 + $0x3c] sm:$0xf]
    %v101 = vld [vmem:[%s2] sm:$0x1]
    %v103 = vlaneseq
    %v104 = vshrl.u32 %v103, 7
    %v105 = vsub.s32 0, %v104
    %v106 = vrot.slane %v101, %v105
    %v110 = vunpack.c.l.b16 %v83
    %v111 = vunpack.c.l.b16 %v84
    %v112 = vpack.c.b16 %v111, %v110
    %v130 = vunpack.c.l.b16 %v85
    %v131 = vunpack.c.l.b16 %v86
    %v132 = vunpack.c.l.b16 %v87
    %v133 = vunpack.c.l.b16 %v88
    %v134 = vunpack.c.l.b16 %v89
    %v135 = vunpack.c.l.b16 %v90
    %v136 = vunpack.c.l.b16 %v91
    %v137 = vunpack.c.l.b16 %v92
    %v138 = vunpack.c.l.b16 %v93
    %v139 = vunpack.c.l.b16 %v94
    %v140 = vunpack.c.l.b16 %v95
    %v141 = vunpack.c.l.b16 %v96
    %v142 = vunpack.c.l.b16 %v97
    %v143 = vunpack.c.l.b16 %v98
    %v144 = vunpack.c.l.b16 %v99
    %v145 = vunpack.c.l.b16 %v100
    %v146 = vpack.c.b16 %v131, %v130
    %v147 = vpack.c.b16 %v133, %v132
    %v148 = vpack.c.b16 %v135, %v134
    %v149 = vpack.c.b16 %v137, %v136
    %v150 = vpack.c.b16 %v139, %v138
    %v151 = vpack.c.b16 %v141, %v140
    %v152 = vpack.c.b16 %v143, %v142
    %v153 = vpack.c.b16 %v145, %v144
    %162 = vmatprep.subr.bf16.mxu0 0
    %163 = vmatpush1.bf16.msra.mxu0 %v153
    %164 = vmatprep.subr.bf16.mxu0 0
    %165 = vmatpush1.bf16.msra.mxu0 %v152
    %166 = vmatprep.subr.bf16.mxu0 0
    %167 = vmatpush1.bf16.msra.mxu0 %v151
    %168 = vmatprep.subr.bf16.mxu0 0
    %169 = vmatpush1.bf16.msra.mxu0 %v150
    %170 = vmatprep.subr.bf16.mxu0 0
    %171 = vmatpush1.bf16.msra.mxu0 %v149
    %172 = vmatprep.subr.bf16.mxu0 0
    %173 = vmatpush1.bf16.msra.mxu0 %v148
    %174 = vmatprep.subr.bf16.mxu0 0
    %175 = vmatpush1.bf16.msra.mxu0 %v147
    %176 = vmatprep.subr.bf16.mxu0 0
    %177 = vmatpush1.bf16.msra.mxu0 %v146
    %178 = vmatprep.subr.bf16.mxu0 0
    %179 = vmatpush2.bf16.msra.mxu0 0
    %180 = vmatprep.subr.bf16.mxu0 0
    %181 = vmatpush2.bf16.msra.mxu0 0
    %182 = vmatprep.subr.bf16.mxu0 0
    %183 = vmatpush2.bf16.msra.mxu0 0
    %184 = vmatprep.subr.bf16.mxu0 0
    %185 = vmatpush2.bf16.msra.mxu0 0
    %186 = vmatprep.subr.bf16.mxu0 0
    %187 = vmatpush2.bf16.msra.mxu0 0
    %188 = vmatprep.subr.bf16.mxu0 0
    %189 = vmatpush2.bf16.msra.mxu0 0
    %190 = vmatprep.subr.bf16.mxu0 0
    %191 = vmatpush2.bf16.msra.mxu0 0
    %192 = vmatprep.subr.bf16.mxu0 0
    %193 = vmatpush2.bf16.msra.mxu0 0
    %194 = vmatprep.mubr.bf16.mxu0 0
    %195 = vmatmul.mubr.bf16.gmra.mxu0 %v112
    %v196 = vpop.f32.mrf.mxu0
    %v197 = vadd.f32 %v106, %v196
    %v198 = vpop.f32.mrf.mxu0
    %v199 = vpop.f32.mrf.mxu0
    %v200 = vadd.f32 %v106, %v199
    %v201 = vpop.f32.mrf.mxu0
    %202 = vdwg.mxu0
    %v203 = vmax.f32 %v197, 0.0
    %v204 = vmax.f32 %v200, 0.0
    %v205 = vpack.c.bf16 %v204, %v203
    %v206 = vld [vmem:[#allocation7] sm:$0xf]
    %v207 = vld [vmem:[#allocation7 + $0x4] sm:$0xf]
    %v208 = vld [vmem:[#allocation7 + $0x8] sm:$0xf]
    %v209 = vld [vmem:[#allocation7 + $0xc] sm:$0xf]
    %v210 = vld [vmem:[#allocation7 + $0x10] sm:$0xf]
    %v211 = vld [vmem:[#allocation7 + $0x14] sm:$0xf]
    %v212 = vld [vmem:[#allocation7 + $0x18] sm:$0xf]
    %v213 = vld [vmem:[#allocation7 + $0x1c] sm:$0xf]
    %v214 = vld [vmem:[#allocation7 + $0x20] sm:$0xf]
    %v215 = vld [vmem:[#allocation7 + $0x24] sm:$0xf]
    %v216 = vld [vmem:[#allocation7 + $0x28] sm:$0xf]
    %v217 = vld [vmem:[#allocation7 + $0x2c] sm:$0xf]
    %v218 = vld [vmem:[#allocation7 + $0x30] sm:$0xf]
    %v219 = vld [vmem:[#allocation7 + $0x34] sm:$0xf]
    %v220 = vld [vmem:[#allocation7 + $0x38] sm:$0xf]
    %v221 = vld [vmem:[#allocation7 + $0x3c] sm:$0xf]
    %v222 = vld [vmem:[%s4] sm:$0x1]
    %v224 = vlaneseq
    %v225 = vshrl.u32 %v224, 7
    %v226 = vsub.s32 0, %v225
    %v227 = vrot.slane %v222, %v226
    %v245 = vunpack.c.l.b16 %v206
    %v246 = vunpack.c.l.b16 %v207
    %v247 = vunpack.c.l.b16 %v208
    %v248 = vunpack.c.l.b16 %v209
    %v249 = vunpack.c.l.b16 %v210
    %v250 = vunpack.c.l.b16 %v211
    %v251 = vunpack.c.l.b16 %v212
    %v252 = vunpack.c.l.b16 %v213
    %v253 = vunpack.c.l.b16 %v214
    %v254 = vunpack.c.l.b16 %v215
    %v255 = vunpack.c.l.b16 %v216
    %v256 = vunpack.c.l.b16 %v217
    %v257 = vunpack.c.l.b16 %v218
    %v258 = vunpack.c.l.b16 %v219
    %v259 = vunpack.c.l.b16 %v220
    %v260 = vunpack.c.l.b16 %v221
    %v261 = vpack.c.b16 %v246, %v245
    %v262 = vpack.c.b16 %v248, %v247
    %v263 = vpack.c.b16 %v250, %v249
    %v264 = vpack.c.b16 %v252, %v251
    %v265 = vpack.c.b16 %v254, %v253
    %v266 = vpack.c.b16 %v256, %v255
    %v267 = vpack.c.b16 %v258, %v257
    %v268 = vpack.c.b16 %v260, %v259
    %277 = vmatprep.subr.bf16.mxu0 0
    %278 = vmatpush1.bf16.msra.mxu0 %v268
    %279 = vmatprep.subr.bf16.mxu0 0
    %280 = vmatpush1.bf16.msra.mxu0 %v267
    %281 = vmatprep.subr.bf16.mxu0 0
    %282 = vmatpush1.bf16.msra.mxu0 %v266
    %283 = vmatprep.subr.bf16.mxu0 0
    %284 = vmatpush1.bf16.msra.mxu0 %v265
    %285 = vmatprep.subr.bf16.mxu0 0
    %286 = vmatpush1.bf16.msra.mxu0 %v264
    %287 = vmatprep.subr.bf16.mxu0 0
    %288 = vmatpush1.bf16.msra.mxu0 %v263
    %289 = vmatprep.subr.bf16.mxu0 0
    %290 = vmatpush1.bf16.msra.mxu0 %v262
    %291 = vmatprep.subr.bf16.mxu0 0
    %292 = vmatpush1.bf16.msra.mxu0 %v261
    %293 = vmatprep.subr.bf16.mxu0 0
    %294 = vmatpush2.bf16.msra.mxu0 0
    %295 = vmatprep.subr.bf16.mxu0 0
    %296 = vmatpush2.bf16.msra.mxu0 0
    %297 = vmatprep.subr.bf16.mxu0 0
    %298 = vmatpush2.bf16.msra.mxu0 0
    %299 = vmatprep.subr.bf16.mxu0 0
    %300 = vmatpush2.bf16.msra.mxu0 0
    %301 = vmatprep.subr.bf16.mxu0 0
    %302 = vmatpush2.bf16.msra.mxu0 0
    %303 = vmatprep.subr.bf16.mxu0 0
    %304 = vmatpush2.bf16.msra.mxu0 0
    %305 = vmatprep.subr.bf16.mxu0 0
    %306 = vmatpush2.bf16.msra.mxu0 0
    %307 = vmatprep.subr.bf16.mxu0 0
    %308 = vmatpush2.bf16.msra.mxu0 0
    %309 = vmatprep.mubr.bf16.mxu0 0
    %310 = vmatmul.mubr.bf16.gmra.mxu0 %v205
    %v311 = vpop.f32.mrf.mxu0
    %v312 = vadd.f32 %v227, %v311
    %v313 = vpop.f32.mrf.mxu0
    %v314 = vpop.f32.mrf.mxu0
    %v315 = vadd.f32 %v227, %v314
    %v316 = vpop.f32.mrf.mxu0
    %317 = vdwg.mxu0
    %v318 = vmax.f32 %v312, 0.0
    %v319 = vmax.f32 %v315, 0.0
    %v320 = vpack.c.bf16 %v319, %v318
    %v321 = vld [vmem:[#allocation8] sm:$0xf]
    %v322 = vld [vmem:[#allocation8 + $0x4] sm:$0xf]
    %v323 = vld [vmem:[#allocation8 + $0x8] sm:$0xf]
    %v324 = vld [vmem:[#allocation8 + $0xc] sm:$0xf]
    %v325 = vld [vmem:[#allocation8 + $0x10] sm:$0xf]
    %v326 = vld [vmem:[#allocation8 + $0x14] sm:$0xf]
    %v327 = vld [vmem:[#allocation8 + $0x18] sm:$0xf]
    %v328 = vld [vmem:[#allocation8 + $0x1c] sm:$0xf]
    %v329 = vld [vmem:[#allocation8 + $0x20] sm:$0xf]
    %v330 = vld [vmem:[#allocation8 + $0x24] sm:$0xf]
    %v331 = vld [vmem:[#allocation8 + $0x28] sm:$0xf]
    %v332 = vld [vmem:[#allocation8 + $0x2c] sm:$0xf]
    %v333 = vld [vmem:[#allocation8 + $0x30] sm:$0xf]
    %v334 = vld [vmem:[#allocation8 + $0x34] sm:$0xf]
    %v335 = vld [vmem:[#allocation8 + $0x38] sm:$0xf]
    %v336 = vld [vmem:[#allocation8 + $0x3c] sm:$0xf]
    %v337 = vld [vmem:[%s6] sm:$0x1]
    %v339 = vlaneseq
    %v340 = vshrl.u32 %v339, 7
    %v341 = vsub.s32 0, %v340
    %v342 = vrot.slane %v337, %v341
    %v360 = vunpack.c.l.b16 %v321
    %v361 = vunpack.c.l.b16 %v322
    %v362 = vunpack.c.l.b16 %v323
    %v363 = vunpack.c.l.b16 %v324
    %v364 = vunpack.c.l.b16 %v325
    %v365 = vunpack.c.l.b16 %v326
    %v366 = vunpack.c.l.b16 %v327
    %v367 = vunpack.c.l.b16 %v328
    %v368 = vunpack.c.l.b16 %v329
    %v369 = vunpack.c.l.b16 %v330
    %v370 = vunpack.c.l.b16 %v331
    %v371 = vunpack.c.l.b16 %v332
    %v372 = vunpack.c.l.b16 %v333
    %v373 = vunpack.c.l.b16 %v334
    %v374 = vunpack.c.l.b16 %v335
    %v375 = vunpack.c.l.b16 %v336
    %v376 = vpack.c.b16 %v361, %v360
    %v377 = vpack.c.b16 %v363, %v362
    %v378 = vpack.c.b16 %v365, %v364
    %v379 = vpack.c.b16 %v367, %v366
    %v380 = vpack.c.b16 %v369, %v368
    %v381 = vpack.c.b16 %v371, %v370
    %v382 = vpack.c.b16 %v373, %v372
    %v383 = vpack.c.b16 %v375, %v374
    %392 = vmatprep.subr.bf16.mxu0 0
    %393 = vmatpush1.bf16.msra.mxu0 %v383
    %394 = vmatprep.subr.bf16.mxu0 0
    %395 = vmatpush1.bf16.msra.mxu0 %v382
    %396 = vmatprep.subr.bf16.mxu0 0
    %397 = vmatpush1.bf16.msra.mxu0 %v381
    %398 = vmatprep.subr.bf16.mxu0 0
    %399 = vmatpush1.bf16.msra.mxu0 %v380
    %400 = vmatprep.subr.bf16.mxu0 0
    %401 = vmatpush1.bf16.msra.mxu0 %v379
    %402 = vmatprep.subr.bf16.mxu0 0
    %403 = vmatpush1.bf16.msra.mxu0 %v378
    %404 = vmatprep.subr.bf16.mxu0 0
    %405 = vmatpush1.bf16.msra.mxu0 %v377
    %406 = vmatprep.subr.bf16.mxu0 0
    %407 = vmatpush1.bf16.msra.mxu0 %v376
    %408 = vmatprep.subr.bf16.mxu0 0
    %409 = vmatpush2.bf16.msra.mxu0 0
    %410 = vmatprep.subr.bf16.mxu0 0
    %411 = vmatpush2.bf16.msra.mxu0 0
    %412 = vmatprep.subr.bf16.mxu0 0
    %413 = vmatpush2.bf16.msra.mxu0 0
    %414 = vmatprep.subr.bf16.mxu0 0
    %415 = vmatpush2.bf16.msra.mxu0 0
    %416 = vmatprep.subr.bf16.mxu0 0
    %417 = vmatpush2.bf16.msra.mxu0 0
    %418 = vmatprep.subr.bf16.mxu0 0
    %419 = vmatpush2.bf16.msra.mxu0 0
    %420 = vmatprep.subr.bf16.mxu0 0
    %421 = vmatpush2.bf16.msra.mxu0 0
    %422 = vmatprep.subr.bf16.mxu0 0
    %423 = vmatpush2.bf16.msra.mxu0 0
    %424 = vmatprep.mubr.bf16.mxu0 0
    %425 = vmatmul.mubr.bf16.gmra.mxu0 %v320
    %v426 = vpop.f32.mrf.mxu0
    %v427 = vadd.f32 %v342, %v426
    %v428 = vpop.f32.mrf.mxu0
    %v429 = vpop.f32.mrf.mxu0
    %v430 = vadd.f32 %v342, %v429
    %v431 = vpop.f32.mrf.mxu0
    %432 = vdwg.mxu0
    %v433 = vlaneseq
    %v434 = vand.u32 %v433, 127
    %vm435 = vcmp.ge.s32.totalorder %v434, 8
    %v436 = vmax.f32 %v427, -20.0
    %v437 = vmax.f32 %v430, -20.0
    %v438 = vmin.f32 %v436, 2.0
    %v439 = vmin.f32 %v437, 2.0
    %v440 = vsel %vm435, %v438, %v427
    %v441 = vsel %vm435, %v439, %v430
    %442 = vst [vmem:[#allocation10] sm:$0xff] %v440
    %443 = vst [vmem:[#allocation10 + $0x8] sm:$0xff] %v441
    // Predicated region
    $region46: #{tpu_custom_call.1} parent=1 // pred_check
      _
    $region47: #{tpu_custom_call.1} parent=1 // pred_check_branch
      %445 = sbr.rel (0) target = $region49
    $region48: #{tpu_custom_call.1} parent=1 // pred_region
      %s447 = ssub.s32 256, 256
      %448 = vsyncadd [#allocation4], %s447
      %s449 = sshll.u32 [#allocation10], 4
      %s450 = int_to_ptr.vmem [resolvable:$true] %s449
      %455 = dma.vmem_to_hbm [thread:$0]  %s450, 256, %s7, [#allocation4], 128, 128, 8
    $region49: #{tpu_custom_call.1} parent=1 // pred_fallthru
      _
    // Predicated region
    $region50: #{tpu_custom_call.1} parent=1 // pred_check
      _
    $region51: #{tpu_custom_call.1} parent=1 // pred_check_branch
      %457 = sbr.rel (0) target = $region53
    $region52: #{tpu_custom_call.1} parent=1 // pred_region
      %458 = dma.done [#allocation4], 256
    $region53: #{tpu_custom_call.1} parent=1 // pred_fallthru
      _
    %459 = vsyncpa [#allocation3], 1
    %460 = vsyncpa [#allocation6], 1
    %461 = vsyncpa [#allocation9], 1
    %462 = vsyncpa [#allocation4], 1

// kernel: tpu_custom_call.1
$region0: #{tpu_custom_call.1}
  #allocation0 [shape = 'u32[]', space=smem, size = 0x4, offset = 0x4, fixed_abs, tag = 'smem constant byte address 0x4 - core index']
  #allocation1 [shape = 'u32[144,128]{1,0:T(1,128)}', space=vmem, size = 0x12000, scoped, tag = 'internal scratch']
  %s0 = inlined_call_operand.hbm [shape: bf16[16,128], index: 0, kind: input, shape index: {}]
  %s1 = inlined_call_operand.hbm [shape: bf16[128,128], index: 1, kind: input, shape index: {}]
  %s2 = inlined_call_operand.vmem [shape: f32[1,128], index: 2, kind: input, shape index: {}]
  %s3 = inlined_call_operand.hbm [shape: bf16[128,128], index: 3, kind: input, shape index: {}]
  %s4 = inlined_call_operand.vmem [shape: f32[1,128], index: 4, kind: input, shape index: {}]
  %s5 = inlined_call_operand.hbm [shape: bf16[128,128], index: 5, kind: input, shape index: {}]
  %s6 = inlined_call_operand.vmem [shape: f32[1,128], index: 6, kind: input, shape index: {}]
  %s7 = inlined_call_operand.hbm [shape: f32[16,128], index: 7, kind: output, shape index: {}]
  %s8 = sld [smem:[#allocation0]]
  $region54: #{tpu_custom_call.1} parent=0
    _
  %s10 = ssub.s32 1, %s8
  %s11 = scalar_select 0, %s10, %s8
  $region1: #{tpu_custom_call.1} parent=0
    #allocation2 [shape = 'u8[4096]{0}', space=vmem, size = 0x1000, scoped, tag = 'input window, operand 0, single buffered']
    #allocation3 [shape = 's32[1]{0}', space=sflag, size = 0x4, scoped, tag = 'scoped memory for tpu_custom_call.1']
    #allocation4 [shape = 's32[1]{0}', space=sflag, size = 0x4, scoped, tag = 'scoped memory for tpu_custom_call.1']
    #allocation5 [shape = 'u8[32768]{0}', space=vmem, size = 0x8000, scoped, tag = 'input window, operand 1, single buffered']
    #allocation6 [shape = 's32[1]{0}', space=sflag, size = 0x4, scoped, tag = 'scoped memory for tpu_custom_call.1']
    #allocation7 [shape = 'u8[32768]{0}', space=vmem, size = 0x8000, scoped, tag = 'input window, operand 3, single buffered']
    #allocation8 [shape = 'u8[32768]{0}', space=vmem, size = 0x8000, scoped, tag = 'input window, operand 5, single buffered']
    #allocation9 [shape = 's32[1]{0}', space=sflag, size = 0x4, scoped, tag = 'scoped memory for tpu_custom_call.1']
    #allocation10 [shape = 'u8[8192]{0}', space=vmem, size = 0x2000, scoped, tag = 'output window, operand 0, single buffered']
    %12 = vsyncpa [#allocation3], 0
    %13 = vsyncpa [#allocation6], 0
    %14 = vsyncpa [#allocation9], 0
    %15 = vsyncpa [#allocation4], 0
    // Predicated region
    $region2: #{tpu_custom_call.1} parent=1 // pred_check
      _
    $region3: #{tpu_custom_call.1} parent=1 // pred_check_branch
      %17 = sbr.rel (0) target = $region5
    $region4: #{tpu_custom_call.1} parent=1 // pred_region
      %s19 = ssub.s32 128, 128
      %20 = vsyncadd [#allocation3], %s19
      %s21 = sshll.u32 [#allocation2], 4
      %s22 = int_to_ptr.vmem [resolvable:$true] %s21
      %27 = dma.hbm_to_vmem [thread:$0]  %s0, 128, %s22, [#allocation3], 64, 64, 4
    $region5: #{tpu_custom_call.1} parent=1 // pred_fallthru
      _
    // Predicated region
    $region6: #{tpu_custom_call.1} parent=1 // pred_check
      _
    $region7: #{tpu_custom_call.1} parent=1 // pred_check_branch
      %29 = sbr.rel (0) target = $region9
    $region8: #{tpu_custom_call.1} parent=1 // pred_region
      %s31 = ssub.s32 1024, 1024
      %32 = vsyncadd [#allocation6], %s31
      %s33 = sshll.u32 [#allocation5], 4
      %s34 = int_to_ptr.vmem [resolvable:$true] %s33
      %39 = dma.hbm_to_vmem [thread:$0]  %s1, 1024, %s34, [#allocation6], 64, 64, 4
    $region9: #{tpu_custom_call.1} parent=1 // pred_fallthru
      _
    // Predicated region
    $region10: #{tpu_custom_call.1} parent=1 // pred_check
      _
    $region11: #{tpu_custom_call.1} parent=1 // pred_check_branch
      %41 = sbr.rel (0) target = $region13
    $region12: #{tpu_custom_call.1} parent=1 // pred_region
      _
    $region13: #{tpu_custom_call.1} parent=1 // pred_fallthru
      _
    // Predicated region
    $region14: #{tpu_custom_call.1} parent=1 // pred_check
      _
    $region15: #{tpu_custom_call.1} parent=1 // pred_check_branch
      %43 = sbr.rel (0) target = $region17
    $region16: #{tpu_custom_call.1} parent=1 // pred_region
      %s45 = ssub.s32 1024, 1024
      %46 = vsyncadd [#allocation6], %s45
      %s47 = sshll.u32 [#allocation7], 4
      %s48 = int_to_ptr.vmem [resolvable:$true] %s47
      %53 = dma.hbm_to_vmem [thread:$0]  %s3, 1024, %s48, [#allocation6], 64, 64, 4
    $region17: #{tpu_custom_call.1} parent=1 // pred_fallthru
      _
    // Predicated region
    $region18: #{tpu_custom_call.1} parent=1 // pred_check
      _
    $region19: #{tpu_custom_call.1} parent=1 // pred_check_branch
      %55 = sbr.rel (0) target = $region21
    $region20: #{tpu_custom_call.1} parent=1 // pred_region
      _
    $region21: #{tpu_custom_call.1} parent=1 // pred_fallthru
      _
    // Predicated region
    $region22: #{tpu_custom_call.1} parent=1 // pred_check
      _
    $region23: #{tpu_custom_call.1} parent=1 // pred_check_branch
      %57 = sbr.rel (0) target = $region25
    $region24: #{tpu_custom_call.1} parent=1 // pred_region
      %s59 = ssub.s32 1024, 1024
      %60 = vsyncadd [#allocation9], %s59
      %s61 = sshll.u32 [#allocation8], 4
      %s62 = int_to_ptr.vmem [resolvable:$true] %s61
      %67 = dma.hbm_to_vmem [thread:$0]  %s5, 1024, %s62, [#allocation9], 64, 64, 4
    $region25: #{tpu_custom_call.1} parent=1 // pred_fallthru
      _
    // Predicated region
    $region26: #{tpu_custom_call.1} parent=1 // pred_check
      _
    $region27: #{tpu_custom_call.1} parent=1 // pred_check_branch
      %69 = sbr.rel (0) target = $region29
    $region28: #{tpu_custom_call.1} parent=1 // pred_region
      _
    $region29: #{tpu_custom_call.1} parent=1 // pred_fallthru
      _
    // Predicated region
    $region30: #{tpu_custom_call.1} parent=1 // pred_check
      _
    $region31: #{tpu_custom_call.1} parent=1 // pred_check_branch
      %71 = sbr.rel (0) target = $region33
    $region32: #{tpu_custom_call.1} parent=1 // pred_region
      %72 = dma.done [#allocation3], 128
    $region33: #{tpu_custom_call.1} parent=1 // pred_fallthru
      _
    // Predicated region
    $region34: #{tpu_custom_call.1} parent=1 // pred_check
      _
    $region35: #{tpu_custom_call.1} parent=1 // pred_check_branch
      %74 = sbr.rel (0) target = $region37
    $region36: #{tpu_custom_call.1} parent=1 // pred_region
      %75 = dma.done [#allocation6], 1024
    $region37: #{tpu_custom_call.1} parent=1 // pred_fallthru
      _
    // Predicated region
    $region38: #{tpu_custom_call.1} parent=1 // pred_check
      _
    $region39: #{tpu_custom_call.1} parent=1 // pred_check_branch
      %77 = sbr.rel (0) target = $region41
    $region40: #{tpu_custom_call.1} parent=1 // pred_region
      %78 = dma.done [#allocation6], 1024
    $region41: #{tpu_custom_call.1} parent=1 // pred_fallthru
      _
    // Predicated region
    $region42: #{tpu_custom_call.1} parent=1 // pred_check
      _
    $region43: #{tpu_custom_call.1} parent=1 // pred_check_branch
      %80 = sbr.rel (0) target = $region45
    $region44: #{tpu_custom_call.1} parent=1 // pred_region
      %81 = dma.done [#allocation9], 1024
    $region45: #{tpu_custom_call.1} parent=1 // pred_fallthru
      _
    %v83 = vld [vmem:[#allocation2] sm:$0xf]
    %v84 = vld [vmem:[#allocation2 + $0x4] sm:$0xf]
    %v85 = vld [vmem:[#allocation5] sm:$0xf]
    %v86 = vld [vmem:[#allocation5 + $0x4] sm:$0xf]
    %v87 = vld [vmem:[#allocation5 + $0x8] sm:$0xf]
    %v88 = vld [vmem:[#allocation5 + $0xc] sm:$0xf]
    %v89 = vld [vmem:[#allocation5 + $0x10] sm:$0xf]
    %v90 = vld [vmem:[#allocation5 + $0x14] sm:$0xf]
    %v91 = vld [vmem:[#allocation5 + $0x18] sm:$0xf]
    %v92 = vld [vmem:[#allocation5 + $0x1c] sm:$0xf]
    %v93 = vld [vmem:[#allocation5 + $0x20] sm:$0xf]
    %v94 = vld [vmem:[#allocation5 + $0x24] sm:$0xf]
    %v95 = vld [vmem:[#allocation5 + $0x28] sm:$0xf]
    %v96 = vld [vmem:[#allocation5 + $0x2c] sm:$0xf]
    %v97 = vld [vmem:[#allocation5 + $0x30] sm:$0xf]
    %v98 = vld [vmem:[#allocation5 + $0x34] sm:$0xf]
    %v99 = vld [vmem:[#allocation5 + $0x38] sm:$0xf]
    %v100 = vld [vmem:[#allocation5 + $0x3c] sm:$0xf]
    %v101 = vld [vmem:[%s2] sm:$0x1]
    %v103 = vlaneseq
    %v104 = vshrl.u32 %v103, 7
    %v105 = vsub.s32 0, %v104
    %v106 = vrot.slane %v101, %v105
    %v110 = vunpack.c.l.b16 %v83
    %v111 = vunpack.c.l.b16 %v84
    %v112 = vpack.c.b16 %v111, %v110
    %v130 = vunpack.c.l.b16 %v85
    %v131 = vunpack.c.l.b16 %v86
    %v132 = vunpack.c.l.b16 %v87
    %v133 = vunpack.c.l.b16 %v88
    %v134 = vunpack.c.l.b16 %v89
    %v135 = vunpack.c.l.b16 %v90
    %v136 = vunpack.c.l.b16 %v91
    %v137 = vunpack.c.l.b16 %v92
    %v138 = vunpack.c.l.b16 %v93
    %v139 = vunpack.c.l.b16 %v94
    %v140 = vunpack.c.l.b16 %v95
    %v141 = vunpack.c.l.b16 %v96
    %v142 = vunpack.c.l.b16 %v97
    %v143 = vunpack.c.l.b16 %v98
    %v144 = vunpack.c.l.b16 %v99
    %v145 = vunpack.c.l.b16 %v100
    %v146 = vpack.c.b16 %v131, %v130
    %v147 = vpack.c.b16 %v133, %v132
    %v148 = vpack.c.b16 %v135, %v134
    %v149 = vpack.c.b16 %v137, %v136
    %v150 = vpack.c.b16 %v139, %v138
    %v151 = vpack.c.b16 %v141, %v140
    %v152 = vpack.c.b16 %v143, %v142
    %v153 = vpack.c.b16 %v145, %v144
    %162 = vmatprep.subr.bf16.mxu0 0
    %163 = vmatpush1.bf16.msra.mxu0 %v153
    %164 = vmatprep.subr.bf16.mxu0 0
    %165 = vmatpush1.bf16.msra.mxu0 %v152
    %166 = vmatprep.subr.bf16.mxu0 0
    %167 = vmatpush1.bf16.msra.mxu0 %v151
    %168 = vmatprep.subr.bf16.mxu0 0
    %169 = vmatpush1.bf16.msra.mxu0 %v150
    %170 = vmatprep.subr.bf16.mxu0 0
    %171 = vmatpush1.bf16.msra.mxu0 %v149
    %172 = vmatprep.subr.bf16.mxu0 0
    %173 = vmatpush1.bf16.msra.mxu0 %v148
    %174 = vmatprep.subr.bf16.mxu0 0
    %175 = vmatpush1.bf16.msra.mxu0 %v147
    %176 = vmatprep.subr.bf16.mxu0 0
    %177 = vmatpush1.bf16.msra.mxu0 %v146
    %178 = vmatprep.subr.bf16.mxu0 0
    %179 = vmatpush2.bf16.msra.mxu0 0
    %180 = vmatprep.subr.bf16.mxu0 0
    %181 = vmatpush2.bf16.msra.mxu0 0
    %182 = vmatprep.subr.bf16.mxu0 0
    %183 = vmatpush2.bf16.msra.mxu0 0
    %184 = vmatprep.subr.bf16.mxu0 0
    %185 = vmatpush2.bf16.msra.mxu0 0
    %186 = vmatprep.subr.bf16.mxu0 0
    %187 = vmatpush2.bf16.msra.mxu0 0
    %188 = vmatprep.subr.bf16.mxu0 0
    %189 = vmatpush2.bf16.msra.mxu0 0
    %190 = vmatprep.subr.bf16.mxu0 0
    %191 = vmatpush2.bf16.msra.mxu0 0
    %192 = vmatprep.subr.bf16.mxu0 0
    %193 = vmatpush2.bf16.msra.mxu0 0
    %194 = vmatprep.mubr.bf16.mxu0 0
    %195 = vmatmul.mubr.bf16.gmra.mxu0 %v112
    %v196 = vpop.f32.mrf.mxu0
    %v197 = vadd.f32 %v106, %v196
    %v198 = vpop.f32.mrf.mxu0
    %v199 = vpop.f32.mrf.mxu0
    %v200 = vadd.f32 %v106, %v199
    %v201 = vpop.f32.mrf.mxu0
    %202 = vdwg.mxu0
    %v203 = vmax.f32 %v197, 0.0
    %v204 = vmax.f32 %v200, 0.0
    %v205 = vpack.c.bf16 %v204, %v203
    %v206 = vld [vmem:[#allocation7] sm:$0xf]
    %v207 = vld [vmem:[#allocation7 + $0x4] sm:$0xf]
    %v208 = vld [vmem:[#allocation7 + $0x8] sm:$0xf]
    %v209 = vld [vmem:[#allocation7 + $0xc] sm:$0xf]
    %v210 = vld [vmem:[#allocation7 + $0x10] sm:$0xf]
    %v211 = vld [vmem:[#allocation7 + $0x14] sm:$0xf]
    %v212 = vld [vmem:[#allocation7 + $0x18] sm:$0xf]
    %v213 = vld [vmem:[#allocation7 + $0x1c] sm:$0xf]
    %v214 = vld [vmem:[#allocation7 + $0x20] sm:$0xf]
    %v215 = vld [vmem:[#allocation7 + $0x24] sm:$0xf]
    %v216 = vld [vmem:[#allocation7 + $0x28] sm:$0xf]
    %v217 = vld [vmem:[#allocation7 + $0x2c] sm:$0xf]
    %v218 = vld [vmem:[#allocation7 + $0x30] sm:$0xf]
    %v219 = vld [vmem:[#allocation7 + $0x34] sm:$0xf]
    %v220 = vld [vmem:[#allocation7 + $0x38] sm:$0xf]
    %v221 = vld [vmem:[#allocation7 + $0x3c] sm:$0xf]
    %v222 = vld [vmem:[%s4] sm:$0x1]
    %v224 = vlaneseq
    %v225 = vshrl.u32 %v224, 7
    %v226 = vsub.s32 0, %v225
    %v227 = vrot.slane %v222, %v226
    %v245 = vunpack.c.l.b16 %v206
    %v246 = vunpack.c.l.b16 %v207
    %v247 = vunpack.c.l.b16 %v208
    %v248 = vunpack.c.l.b16 %v209
    %v249 = vunpack.c.l.b16 %v210
    %v250 = vunpack.c.l.b16 %v211
    %v251 = vunpack.c.l.b16 %v212
    %v252 = vunpack.c.l.b16 %v213
    %v253 = vunpack.c.l.b16 %v214
    %v254 = vunpack.c.l.b16 %v215
    %v255 = vunpack.c.l.b16 %v216
    %v256 = vunpack.c.l.b16 %v217
    %v257 = vunpack.c.l.b16 %v218
    %v258 = vunpack.c.l.b16 %v219
    %v259 = vunpack.c.l.b16 %v220
    %v260 = vunpack.c.l.b16 %v221
    %v261 = vpack.c.b16 %v246, %v245
    %v262 = vpack.c.b16 %v248, %v247
    %v263 = vpack.c.b16 %v250, %v249
    %v264 = vpack.c.b16 %v252, %v251
    %v265 = vpack.c.b16 %v254, %v253
    %v266 = vpack.c.b16 %v256, %v255
    %v267 = vpack.c.b16 %v258, %v257
    %v268 = vpack.c.b16 %v260, %v259
    %277 = vmatprep.subr.bf16.mxu0 0
    %278 = vmatpush1.bf16.msra.mxu0 %v268
    %279 = vmatprep.subr.bf16.mxu0 0
    %280 = vmatpush1.bf16.msra.mxu0 %v267
    %281 = vmatprep.subr.bf16.mxu0 0
    %282 = vmatpush1.bf16.msra.mxu0 %v266
    %283 = vmatprep.subr.bf16.mxu0 0
    %284 = vmatpush1.bf16.msra.mxu0 %v265
    %285 = vmatprep.subr.bf16.mxu0 0
    %286 = vmatpush1.bf16.msra.mxu0 %v264
    %287 = vmatprep.subr.bf16.mxu0 0
    %288 = vmatpush1.bf16.msra.mxu0 %v263
    %289 = vmatprep.subr.bf16.mxu0 0
    %290 = vmatpush1.bf16.msra.mxu0 %v262
    %291 = vmatprep.subr.bf16.mxu0 0
    %292 = vmatpush1.bf16.msra.mxu0 %v261
    %293 = vmatprep.subr.bf16.mxu0 0
    %294 = vmatpush2.bf16.msra.mxu0 0
    %295 = vmatprep.subr.bf16.mxu0 0
    %296 = vmatpush2.bf16.msra.mxu0 0
    %297 = vmatprep.subr.bf16.mxu0 0
    %298 = vmatpush2.bf16.msra.mxu0 0
    %299 = vmatprep.subr.bf16.mxu0 0
    %300 = vmatpush2.bf16.msra.mxu0 0
    %301 = vmatprep.subr.bf16.mxu0 0
    %302 = vmatpush2.bf16.msra.mxu0 0
    %303 = vmatprep.subr.bf16.mxu0 0
    %304 = vmatpush2.bf16.msra.mxu0 0
    %305 = vmatprep.subr.bf16.mxu0 0
    %306 = vmatpush2.bf16.msra.mxu0 0
    %307 = vmatprep.subr.bf16.mxu0 0
    %308 = vmatpush2.bf16.msra.mxu0 0
    %309 = vmatprep.mubr.bf16.mxu0 0
    %310 = vmatmul.mubr.bf16.gmra.mxu0 %v205
    %v311 = vpop.f32.mrf.mxu0
    %v312 = vadd.f32 %v227, %v311
    %v313 = vpop.f32.mrf.mxu0
    %v314 = vpop.f32.mrf.mxu0
    %v315 = vadd.f32 %v227, %v314
    %v316 = vpop.f32.mrf.mxu0
    %317 = vdwg.mxu0
    %v318 = vmax.f32 %v312, 0.0
    %v319 = vmax.f32 %v315, 0.0
    %v320 = vpack.c.bf16 %v319, %v318
    %v321 = vld [vmem:[#allocation8] sm:$0xf]
    %v322 = vld [vmem:[#allocation8 + $0x4] sm:$0xf]
    %v323 = vld [vmem:[#allocation8 + $0x8] sm:$0xf]
    %v324 = vld [vmem:[#allocation8 + $0xc] sm:$0xf]
    %v325 = vld [vmem:[#allocation8 + $0x10] sm:$0xf]
    %v326 = vld [vmem:[#allocation8 + $0x14] sm:$0xf]
    %v327 = vld [vmem:[#allocation8 + $0x18] sm:$0xf]
    %v328 = vld [vmem:[#allocation8 + $0x1c] sm:$0xf]
    %v329 = vld [vmem:[#allocation8 + $0x20] sm:$0xf]
    %v330 = vld [vmem:[#allocation8 + $0x24] sm:$0xf]
    %v331 = vld [vmem:[#allocation8 + $0x28] sm:$0xf]
    %v332 = vld [vmem:[#allocation8 + $0x2c] sm:$0xf]
    %v333 = vld [vmem:[#allocation8 + $0x30] sm:$0xf]
    %v334 = vld [vmem:[#allocation8 + $0x34] sm:$0xf]
    %v335 = vld [vmem:[#allocation8 + $0x38] sm:$0xf]
    %v336 = vld [vmem:[#allocation8 + $0x3c] sm:$0xf]
    %v337 = vld [vmem:[%s6] sm:$0x1]
    %v339 = vlaneseq
    %v340 = vshrl.u32 %v339, 7
    %v341 = vsub.s32 0, %v340
    %v342 = vrot.slane %v337, %v341
    %v360 = vunpack.c.l.b16 %v321
    %v361 = vunpack.c.l.b16 %v322
    %v362 = vunpack.c.l.b16 %v323
    %v363 = vunpack.c.l.b16 %v324
    %v364 = vunpack.c.l.b16 %v325
    %v365 = vunpack.c.l.b16 %v326
    %v366 = vunpack.c.l.b16 %v327
    %v367 = vunpack.c.l.b16 %v328
    %v368 = vunpack.c.l.b16 %v329
    %v369 = vunpack.c.l.b16 %v330
    %v370 = vunpack.c.l.b16 %v331
    %v371 = vunpack.c.l.b16 %v332
    %v372 = vunpack.c.l.b16 %v333
    %v373 = vunpack.c.l.b16 %v334
    %v374 = vunpack.c.l.b16 %v335
    %v375 = vunpack.c.l.b16 %v336
    %v376 = vpack.c.b16 %v361, %v360
    %v377 = vpack.c.b16 %v363, %v362
    %v378 = vpack.c.b16 %v365, %v364
    %v379 = vpack.c.b16 %v367, %v366
    %v380 = vpack.c.b16 %v369, %v368
    %v381 = vpack.c.b16 %v371, %v370
    %v382 = vpack.c.b16 %v373, %v372
    %v383 = vpack.c.b16 %v375, %v374
    %392 = vmatprep.subr.bf16.mxu0 0
    %393 = vmatpush1.bf16.msra.mxu0 %v383
    %394 = vmatprep.subr.bf16.mxu0 0
    %395 = vmatpush1.bf16.msra.mxu0 %v382
    %396 = vmatprep.subr.bf16.mxu0 0
    %397 = vmatpush1.bf16.msra.mxu0 %v381
    %398 = vmatprep.subr.bf16.mxu0 0
    %399 = vmatpush1.bf16.msra.mxu0 %v380
    %400 = vmatprep.subr.bf16.mxu0 0
    %401 = vmatpush1.bf16.msra.mxu0 %v379
    %402 = vmatprep.subr.bf16.mxu0 0
    %403 = vmatpush1.bf16.msra.mxu0 %v378
    %404 = vmatprep.subr.bf16.mxu0 0
    %405 = vmatpush1.bf16.msra.mxu0 %v377
    %406 = vmatprep.subr.bf16.mxu0 0
    %407 = vmatpush1.bf16.msra.mxu0 %v376
    %408 = vmatprep.subr.bf16.mxu0 0
    %409 = vmatpush2.bf16.msra.mxu0 0
    %410 = vmatprep.subr.bf16.mxu0 0
    %411 = vmatpush2.bf16.msra.mxu0 0
    %412 = vmatprep.subr.bf16.mxu0 0
    %413 = vmatpush2.bf16.msra.mxu0 0
    %414 = vmatprep.subr.bf16.mxu0 0
    %415 = vmatpush2.bf16.msra.mxu0 0
    %416 = vmatprep.subr.bf16.mxu0 0
    %417 = vmatpush2.bf16.msra.mxu0 0
    %418 = vmatprep.subr.bf16.mxu0 0
    %419 = vmatpush2.bf16.msra.mxu0 0
    %420 = vmatprep.subr.bf16.mxu0 0
    %421 = vmatpush2.bf16.msra.mxu0 0
    %422 = vmatprep.subr.bf16.mxu0 0
    %423 = vmatpush2.bf16.msra.mxu0 0
    %424 = vmatprep.mubr.bf16.mxu0 0
    %425 = vmatmul.mubr.bf16.gmra.mxu0 %v320
    %v426 = vpop.f32.mrf.mxu0
    %v427 = vadd.f32 %v342, %v426
    %v428 = vpop.f32.mrf.mxu0
    %v429 = vpop.f32.mrf.mxu0
    %v430 = vadd.f32 %v342, %v429
    %v431 = vpop.f32.mrf.mxu0
    %432 = vdwg.mxu0
    %v433 = vlaneseq
    %v434 = vand.u32 %v433, 127
    %vm435 = vcmp.ge.s32.totalorder %v434, 8
    %v436 = vmax.f32 %v427, -20.0
    %v437 = vmax.f32 %v430, -20.0
    %v438 = vmin.f32 %v436, 2.0
    %v439 = vmin.f32 %v437, 2.0
    %v440 = vsel %vm435, %v438, %v427
    %v441 = vsel %vm435, %v439, %v430
    %442 = vst [vmem:[#allocation10] sm:$0xff] %v440
    %443 = vst [vmem:[#allocation10 + $0x8] sm:$0xff] %v441
    // Predicated region
    $region46: #{tpu_custom_call.1} parent=1 // pred_check
      _
    $region47: #{tpu_custom_call.1} parent=1 // pred_check_branch
      %445 = sbr.rel (0) target = $region49
    $region48: #{tpu_custom_call.1} parent=1 // pred_region
      %s447 = ssub.s32 256, 256
      %448 = vsyncadd [#allocation4], %s447
      %s449 = sshll.u32 [#allocation10], 4
      %s450 = int_to_ptr.vmem [resolvable:$true] %s449
      %455 = dma.vmem_to_hbm [thread:$0]  %s450, 256, %s7, [#allocation4], 128, 128, 8
    $region49: #{tpu_custom_call.1} parent=1 // pred_fallthru
      _
    // Predicated region
    $region50: #{tpu_custom_call.1} parent=1 // pred_check
      _
    $region51: #{tpu_custom_call.1} parent=1 // pred_check_branch
      %457 = sbr.rel (0) target = $region53
    $region52: #{tpu_custom_call.1} parent=1 // pred_region
      %458 = dma.done [#allocation4], 256
    $region53: #{tpu_custom_call.1} parent=1 // pred_fallthru
      _
    %459 = vsyncpa [#allocation3], 1
    %460 = vsyncpa [#allocation6], 1
    %461 = vsyncpa [#allocation9], 1
    %462 = vsyncpa [#allocation4], 1

</llo_original>
